<compile_context>
chip_gen: v5e
topology: v5e:2x2
jax: 0.10.0
libtpu: 0.0.40
codegen_flags: <defaults>
</compile_context>

<pallas_src>
import functools
import math

import jax
import jax.numpy as jnp
from jax.experimental import pallas as pl
from jax.experimental.pallas import tpu as pltpu


def _arcface_kernel(flag_ref, x_ref, xscale_ref, w_ref, winv_ref, label_ref,
                    tgt_ref, out_ref, *, block_c):
    j = pl.program_id(0)   # class-tile index (outer grid axis)
    i = pl.program_id(1)   # batch-tile index (inner grid axis; W tile stays resident)

    # Row-scaled x: s * x / max(||x||, 1e-12).  Scale precomputed in the wrapper; the
    # (TB, F) multiply runs in f32 and the result is cast to the matmul dtype (bf16).
    x_s = (x_ref[...] * xscale_ref[...]).astype(w_ref.dtype)          # (TB, F)

    # (TB, F) @ (F, TC) on the MXU with f32 accumulation.
    raw = jnp.dot(x_s, w_ref[...], preferred_element_type=jnp.float32)  # (TB, TC)
    logits = raw * winv_ref[...]                                       # s * cos(theta)

    has_target = flag_ref[i, j] > 0   # scalar SMEM read: does this tile hold any target?

    @pl.when(has_target)
    def _():
        # Only a handful of tiles reach this branch: compare against the global class
        # index and drop in the precomputed per-row s*cos(theta_y + m).
        cls = jax.lax.broadcasted_iota(jnp.int32, logits.shape, 1) + j * block_c
        one_hot = cls == label_ref[...]                                # (TB, TC) bool
        out_ref[...] = jnp.where(one_hot, tgt_ref[...], logits)

    @pl.when(jnp.logical_not(has_target))
    def _():
        out_ref[...] = logits


def _round_up(a, b):
    return (a + b - 1) // b * b


def _vmem_capacity_bytes():
    try:
        return int(pltpu.get_tpu_info().vmem_capacity_bytes)
    except Exception:
        return 64 * 1024 * 1024   # v7x-safe fallback


def _pick_tiles(B, C, F, mm_bytes, budget, block_b, block_c):
    """Largest (TB, TC) <= requested blocks whose double-buffered footprint fits."""
    tb = min(block_b, _round_up(B, 8))
    tc = min(block_c, _round_up(C, 128))

    def need(tb_, tc_):
        per_step = (tb_ * F * 4            # x tile (f32)
                    + F * tc_ * mm_bytes   # W^T tile (bf16 by default)
                    + tb_ * tc_ * 4        # output tile (f32)
                    + tc_ * 4              # w_inv column
                    + 3 * tb_ * 4)         # x_scale, label, target columns
        return 2 * per_step                # double-buffered pipeline

    while need(tb, tc) > budget and tc > 128:
        tc = max(128, _round_up(tc // 2, 128))
    while need(tb, tc) > budget and tb > 8:
        tb = max(8, _round_up(tb // 2, 8))
    return tb, tc


def arcface_forward(x, weight, label=None, *, s=30.0, m=0.5,
                    block_b=256, block_c=2048, matmul_dtype=jnp.bfloat16):
    """ArcFace forward. x: (B, F), weight: (C, F), label: (B,) int or None."""
    B, F = x.shape
    C, F2 = weight.shape
    assert F == F2

    mm_bytes = jnp.dtype(matmul_dtype).itemsize
    vmem_cap = _vmem_capacity_bytes()
    budget = int(vmem_cap * 3) // 4            # leave headroom for compiler scratch
    TB, TC = _pick_tiles(B, C, F, mm_bytes, budget, block_b, block_c)
    Bp, Cp = _round_up(B, TB), _round_up(C, TC)
    nb, nc = Bp // TB, Cp // TC

    x32 = x.astype(jnp.float32)
    w32 = weight.astype(jnp.float32)

    # --- one-time O(B*F) / O(C*F) precomputation (hoisted out of the B*C*F kernel) ---
    inv_xn = jax.lax.rsqrt(
        jnp.maximum(jnp.sum(x32 * x32, axis=1, keepdims=True), 1e-24))        # (B,1)
    w_inv_rows = jax.lax.rsqrt(
        jnp.maximum(jnp.sum(w32 * w32, axis=1, keepdims=True), 1e-24))        # (C,1)

    if label is None:
        s_eff = 1.0           # inference: plain cosine logits, no margin / no scale
        lab = None
    else:
        s_eff = float(s)
        lab = jnp.reshape(label, (-1,)).astype(jnp.int32)

    # Per-row scale with s folded in; padded rows are zero x so any finite scale is fine.
    x_scale = jnp.pad(inv_xn * s_eff, ((0, Bp - B), (0, 0)))                  # (Bp,1) f32
    x_p = jnp.pad(x32, ((0, Bp - B), (0, 0)))                                 # (Bp,F) f32

    # W: pad classes, transpose once to (F, Cp), cast to the matmul dtype.
    # Padded class columns are exactly zero -> zero raw logits -> sliced off below.
    w_pad = jnp.pad(w32, ((0, Cp - C), (0, 0)))
    w_t = w_pad.T.astype(matmul_dtype)                                        # (F, Cp)
    w_inv = jnp.pad(w_inv_rows[:, 0], (0, Cp - C)).reshape(1, Cp)             # (1, Cp) f32

    label_p = jnp.full((Bp, 1), -1, dtype=jnp.int32)     # -1 never matches a class
    target_p = jnp.zeros((Bp, 1), dtype=jnp.float32)
    flags = jnp.zeros((nb, nc), dtype=jnp.int32)
    if lab is not None:
        label_p = label_p.at[:B, 0].set(lab)
        # Exact f32 target logit s*cos(theta_y + m) per row (matches the reference):
        #   cos(acos(c) + m) = c*cos(m) - sqrt(1-c^2)*sin(m)
        x_n = x32 * inv_xn
        w_y = w32[lab] * w_inv_rows[lab]                                      # (B,F)
        cosy = jnp.clip(jnp.sum(x_n * w_y, axis=1), -1.0 + 1e-07, 1.0 - 1e-07)
        tgt = (cosy * math.cos(m)
               - jnp.sqrt(jnp.maximum(1.0 - cosy * cosy, 0.0)) * math.sin(m)) * s_eff
        target_p = target_p.at[:B, 0].set(tgt)
        # Flag table: does batch-tile i contain a label that falls in class-tile j?
        flags = flags.at[jnp.arange(B) // TB, lab // TC].set(1)

    kernel = functools.partial(_arcface_kernel, block_c=TC)

    out = pl.pallas_call(
        kernel,
        out_shape=jax.ShapeDtypeStruct((Bp, Cp), jnp.float32),
        grid_spec=pltpu.PrefetchScalarGridSpec(
            num_scalar_prefetch=1,                 # flags -> SMEM, gates the margin path
            grid=(nc, nb),                         # class tiles outer, batch tiles inner
            in_specs=[
                pl.BlockSpec((TB, F), lambda j, i, flags: (i, 0)),   # x tile (f32)
                pl.BlockSpec((TB, 1), lambda j, i, flags: (i, 0)),   # s / ||x|| per row
                pl.BlockSpec((F, TC), lambda j, i, flags: (0, j)),   # W^T tile (resident over i)
                pl.BlockSpec((1, TC), lambda j, i, flags: (0, j)),   # 1 / ||W_row|| per class
                pl.BlockSpec((TB, 1), lambda j, i, flags: (i, 0)),   # labels
                pl.BlockSpec((TB, 1), lambda j, i, flags: (i, 0)),   # s*cos(theta_y + m)
            ],
            out_specs=pl.BlockSpec((TB, TC), lambda j, i, flags: (i, j)),
        ),
        compiler_params=pltpu.CompilerParams(
            # No reduction axis (F is un-tiled) -> both grid axes independent; lets the
            # two TensorCores on v7x split the tile grid.
            dimension_semantics=("parallel", "parallel"),
            vmem_limit_bytes=budget,
        ),
    )(flags, x_p, x_scale, w_t, w_inv, label_p, target_p)

    if Bp != B or Cp != C:
        out = out[:B, :C]
    return out


if __name__ == "__main__":
    # Small, deterministic example consistent with the module:
    # num_features=32, num_classes=16, batch=8
    B, num_features, num_classes = 8, 32, 16
    s_param, m_param = 30.0, 0.5

    key = jax.random.PRNGKey(0)
    kx, kw, kl = jax.random.split(key, 3)

    x = jax.random.normal(kx, (B, num_features), dtype=jnp.float32)

    # xavier_uniform_ on weight of shape (num_classes, num_features):
    bound = math.sqrt(6.0 / (num_features + num_classes))
    weight = jax.random.uniform(
        kw, (num_classes, num_features), dtype=jnp.float32,
        minval=-bound, maxval=bound,
    )

    label = jax.random.randint(kl, (B,), 0, num_classes, dtype=jnp.int32)

    out = jax.block_until_ready(
        arcface_forward(x, weight, label, s=s_param, m=m_param))

    # Pure-JAX f32 reference (same math as the PyTorch forward).
    xn = x / jnp.maximum(jnp.linalg.norm(x, axis=1, keepdims=True), 1e-12)
    wn = weight / jnp.maximum(jnp.linalg.norm(weight, axis=1, keepdims=True), 1e-12)
    logits = xn @ wn.T
    theta = jnp.arccos(jnp.clip(logits, -1.0 + 1e-07, 1.0 - 1e-07))
    target = jnp.cos(theta + m_param)
    one_hot = jax.nn.one_hot(label, num_classes, dtype=jnp.float32)
    ref = (logits * (1.0 - one_hot) + target * one_hot) * s_param

    assert out.shape == (B, num_classes)
    # bf16 matmul operands (f32 accumulation) -> loosened tolerance vs the f32 reference.
    assert jnp.allclose(out, ref, atol=1.5e-1, rtol=1e-3), "mismatch vs reference (train)"

    # Inference path (label=None) -> plain cosine logits (no margin, no scale).
    out_inf = jax.block_until_ready(arcface_forward(x, weight, None))
    assert out_inf.shape == (B, num_classes)
    assert jnp.allclose(out_inf, logits, atol=1e-2, rtol=1e-3), "mismatch vs reference (infer)"

    print("KERNEL_OK")
</pallas_src>

<mosaic_0001>
module attributes {stable_mosaic.version = 11 : i64} {
  func.func @_arcface_kernel(%arg0: i32, %arg1: i32, %arg2: memref<1x1xi32, #tpu.memory_space<smem>>, %arg3: memref<8x32xf32, #tpu.memory_space<vmem>>, %arg4: memref<8x1xf32, #tpu.memory_space<vmem>>, %arg5: memref<32x128xbf16, #tpu.memory_space<vmem>>, %arg6: memref<1x128xf32, #tpu.memory_space<vmem>>, %arg7: memref<8x1xi32, #tpu.memory_space<vmem>>, %arg8: memref<8x1xf32, #tpu.memory_space<vmem>>, %arg9: memref<8x128xf32, #tpu.memory_space<vmem>>) attributes {dimension_semantics = [#tpu.dimension_semantics<parallel>, #tpu.dimension_semantics<parallel>], iteration_bounds = array<i64: 1, 1>, scalar_prefetch = 1 : i64, scratch_operands = 0 : i64, tpu.core_type = #tpu.core_type<tc>, window_params = [{transform_indices = @transform_0, window_bounds = array<i64: 8, 32>}, {transform_indices = @transform_1, window_bounds = array<i64: 8, 1>}, {transform_indices = @transform_2, window_bounds = array<i64: 32, 128>}, {transform_indices = @transform_3, window_bounds = array<i64: 1, 128>}, {transform_indices = @transform_4, window_bounds = array<i64: 8, 1>}, {transform_indices = @transform_5, window_bounds = array<i64: 8, 1>}, {transform_indices = @transform_6, window_bounds = array<i64: 8, 128>}]} {
    %c0 = arith.constant 0 : index
    %c0_0 = arith.constant 0 : index
    %0 = vector.load %arg3[%c0, %c0_0] : memref<8x32xf32, #tpu.memory_space<vmem>>, vector<8x32xf32>
    %c0_1 = arith.constant 0 : index
    %c0_2 = arith.constant 0 : index
    %1 = vector.load %arg4[%c0_1, %c0_2] : memref<8x1xf32, #tpu.memory_space<vmem>>, vector<8x1xf32>
    %2 = vector.broadcast %1 : vector<8x1xf32> to vector<8x32xf32>
    %3 = arith.mulf %0, %2 : vector<8x32xf32>
    %4 = arith.truncf %3 : vector<8x32xf32> to vector<8x32xbf16>
    %c0_3 = arith.constant 0 : index
    %c0_4 = arith.constant 0 : index
    %5 = vector.load %arg5[%c0_3, %c0_4] : memref<32x128xbf16, #tpu.memory_space<vmem>>, vector<32x128xbf16>
    %cst = arith.constant dense<0.000000e+00> : vector<8x128xf32>
    %6 = tpu.matmul %4, %5, %cst {dimension_numbers = #tpu.dot_dimension_numbers<[1], [0], [0], [1], [0, 0, 1, 1], [], []>} : vector<8x32xbf16>, vector<32x128xbf16>, vector<8x128xf32> -> vector<8x128xf32>
    %c0_5 = arith.constant 0 : index
    %c0_6 = arith.constant 0 : index
    %7 = vector.load %arg6[%c0_5, %c0_6] : memref<1x128xf32, #tpu.memory_space<vmem>>, vector<1x128xf32>
    %8 = vector.broadcast %7 : vector<1x128xf32> to vector<8x128xf32>
    %9 = arith.mulf %6, %8 : vector<8x128xf32>
    %10 = arith.index_cast %arg1 : i32 to index
    %11 = arith.index_cast %arg0 : i32 to index
    %12 = memref.load %arg2[%10, %11] : memref<1x1xi32, #tpu.memory_space<smem>>
    %c0_i32 = arith.constant 0 : i32
    %13 = arith.cmpi sgt, %12, %c0_i32 : i32
    %14 = arith.extui %13 : i1 to i32
    %c0_i32_7 = arith.constant 0 : i32
    %15 = arith.cmpi ne, %14, %c0_i32_7 : i32
    scf.if %15 {
      %19 = tpu.iota {dimensions = array<i32: 1>} : vector<8x128xi32>
      %c128_i32 = arith.constant 128 : i32
      %20 = arith.muli %arg0, %c128_i32 : i32
      %21 = vector.broadcast %20 : i32 to vector<8x128xi32>
      %22 = arith.addi %19, %21 : vector<8x128xi32>
      %c0_9 = arith.constant 0 : index
      %c0_10 = arith.constant 0 : index
      %23 = vector.load %arg7[%c0_9, %c0_10] : memref<8x1xi32, #tpu.memory_space<vmem>>, vector<8x1xi32>
      %24 = vector.broadcast %23 : vector<8x1xi32> to vector<8x128xi32>
      %25 = arith.cmpi eq, %22, %24 : vector<8x128xi32>
      %c0_11 = arith.constant 0 : index
      %c0_12 = arith.constant 0 : index
      %26 = vector.load %arg8[%c0_11, %c0_12] : memref<8x1xf32, #tpu.memory_space<vmem>>, vector<8x1xf32>
      %27 = vector.shape_cast %26 : vector<8x1xf32> to vector<8x1xf32>
      %28 = vector.broadcast %27 : vector<8x1xf32> to vector<8x128xf32>
      %29 = arith.select %25, %28, %9 : vector<8x128xi1>, vector<8x128xf32>
      %c0_13 = arith.constant 0 : index
      %c0_14 = arith.constant 0 : index
      %30 = vector.load %arg9[%c0_13, %c0_14] : memref<8x128xf32, #tpu.memory_space<vmem>>, vector<8x128xf32>
      tpu.vector_store %arg9[%c0_13, %c0_14], %29 {strides = array<i32>} : memref<8x128xf32, #tpu.memory_space<vmem>>, vector<8x128xf32>,
    } else {
    }
    %true = arith.constant true
    %16 = arith.xori %13, %true : i1
    %17 = arith.extui %16 : i1 to i32
    %c0_i32_8 = arith.constant 0 : i32
    %18 = arith.cmpi ne, %17, %c0_i32_8 : i32
    scf.if %18 {
      %c0_9 = arith.constant 0 : index
      %c0_10 = arith.constant 0 : index
      %19 = vector.load %arg9[%c0_9, %c0_10] : memref<8x128xf32, #tpu.memory_space<vmem>>, vector<8x128xf32>
      tpu.vector_store %arg9[%c0_9, %c0_10], %9 {strides = array<i32>} : memref<8x128xf32, #tpu.memory_space<vmem>>, vector<8x128xf32>,
    } else {
    }
    return
  }
  func.func @transform_0(%arg0: i32, %arg1: i32, %arg2: memref<1x1xi32, #tpu.memory_space<smem>>) -> (i32, i32) {
    %c0_i32 = arith.constant 0 : i32
    %c0_i32_0 = arith.constant 0 : i32
    return %arg1, %c0_i32 : i32, i32
  }
  func.func @transform_1(%arg0: i32, %arg1: i32, %arg2: memref<1x1xi32, #tpu.memory_space<smem>>) -> (i32, i32) {
    %c0_i32 = arith.constant 0 : i32
    %c0_i32_0 = arith.constant 0 : i32
    return %arg1, %c0_i32 : i32, i32
  }
  func.func @transform_2(%arg0: i32, %arg1: i32, %arg2: memref<1x1xi32, #tpu.memory_space<smem>>) -> (i32, i32) {
    %c0_i32 = arith.constant 0 : i32
    %c0_i32_0 = arith.constant 0 : i32
    return %c0_i32, %arg0 : i32, i32
  }
  func.func @transform_3(%arg0: i32, %arg1: i32, %arg2: memref<1x1xi32, #tpu.memory_space<smem>>) -> (i32, i32) {
    %c0_i32 = arith.constant 0 : i32
    %c0_i32_0 = arith.constant 0 : i32
    return %c0_i32, %arg0 : i32, i32
  }
  func.func @transform_4(%arg0: i32, %arg1: i32, %arg2: memref<1x1xi32, #tpu.memory_space<smem>>) -> (i32, i32) {
    %c0_i32 = arith.constant 0 : i32
    %c0_i32_0 = arith.constant 0 : i32
    return %arg1, %c0_i32 : i32, i32
  }
  func.func @transform_5(%arg0: i32, %arg1: i32, %arg2: memref<1x1xi32, #tpu.memory_space<smem>>) -> (i32, i32) {
    %c0_i32 = arith.constant 0 : i32
    %c0_i32_0 = arith.constant 0 : i32
    return %arg1, %c0_i32 : i32, i32
  }
  func.func @transform_6(%arg0: i32, %arg1: i32, %arg2: memref<1x1xi32, #tpu.memory_space<smem>>) -> (i32, i32) {
    %c0_i32 = arith.constant 0 : i32
    return %arg1, %arg0 : i32, i32
  }
}

</mosaic_0001>

<llo_original>
// kernel: tpu_custom_call.1
$region0: #{tpu_custom_call.1}
  #allocation0 [shape = 'u32[]', space=smem, size = 0x4, offset = 0x4, fixed_abs, tag = 'smem constant byte address 0x4 - core index']
  #allocation1 [shape = 'u32[72,128]{1,0:T(1,128)}', space=vmem, size = 0x9000, scoped, tag = 'internal scratch']
  #allocation2 [shape = 's32[1]{0}', space=sflag, size = 0x4, scoped, tag = 'scoped memory for tpu_custom_call.1']
  #allocation3 [shape = 's32[1,1]{1,0:T(1,128)S(6)}', space=smem, size = 0x200, scoped, tag = 'prefetched SMEM operand 0']
  %s0 = inlined_call_operand.<no memory space> [shape: s32[1,1], index: 0, kind: input, shape index: {}]
  %s1 = inlined_call_operand.vmem [shape: f32[8,32], index: 1, kind: input, shape index: {}]
  %s2 = inlined_call_operand.vmem [shape: f32[8,1], index: 2, kind: input, shape index: {}]
  %s3 = inlined_call_operand.vmem [shape: bf16[32,128], index: 3, kind: input, shape index: {}]
  %s4 = inlined_call_operand.vmem [shape: f32[1,128], index: 4, kind: input, shape index: {}]
  %s5 = inlined_call_operand.vmem [shape: s32[8,1], index: 5, kind: input, shape index: {}]
  %s6 = inlined_call_operand.vmem [shape: f32[8,1], index: 6, kind: input, shape index: {}]
  %s7 = inlined_call_operand.hbm [shape: f32[8,128], index: 7, kind: output, shape index: {}]
  %s8 = sld [smem:[#allocation0]]
  $region42: #{tpu_custom_call.1} parent=0
    _
  %s10 = ssub.s32 1, %s8
  %s11 = scalar_select 0, %s10, %s8
  %12 = sst [smem:[#allocation3]] %s0
  $region1: #{tpu_custom_call.1} parent=0
    #allocation4 [shape = 'u8[4096]{0}', space=vmem, size = 0x1000, scoped, tag = 'output window, operand 0, single buffered']
    #allocation5 [shape = 's32[1]{0}', space=sflag, size = 0x4, scoped, tag = 'scoped memory for tpu_custom_call.1']
    %13 = vsyncpa [#allocation5], 0
    // Predicated region
    $region2: #{tpu_custom_call.1} parent=1 // pred_check
      _
    $region3: #{tpu_custom_call.1} parent=1 // pred_check_branch
      %15 = sbr.rel (0) target = $region5
    $region4: #{tpu_custom_call.1} parent=1 // pred_region
      _
    $region5: #{tpu_custom_call.1} parent=1 // pred_fallthru
      _
    // Predicated region
    $region6: #{tpu_custom_call.1} parent=1 // pred_check
      _
    $region7: #{tpu_custom_call.1} parent=1 // pred_check_branch
      %17 = sbr.rel (0) target = $region9
    $region8: #{tpu_custom_call.1} parent=1 // pred_region
      _
    $region9: #{tpu_custom_call.1} parent=1 // pred_fallthru
      _
    // Predicated region
    $region10: #{tpu_custom_call.1} parent=1 // pred_check
      _
    $region11: #{tpu_custom_call.1} parent=1 // pred_check_branch
      %19 = sbr.rel (0) target = $region13
    $region12: #{tpu_custom_call.1} parent=1 // pred_region
      _
    $region13: #{tpu_custom_call.1} parent=1 // pred_fallthru
      _
    // Predicated region
    $region14: #{tpu_custom_call.1} parent=1 // pred_check
      _
    $region15: #{tpu_custom_call.1} parent=1 // pred_check_branch
      %21 = sbr.rel (0) target = $region17
    $region16: #{tpu_custom_call.1} parent=1 // pred_region
      _
    $region17: #{tpu_custom_call.1} parent=1 // pred_fallthru
      _
    // Predicated region
    $region18: #{tpu_custom_call.1} parent=1 // pred_check
      _
    $region19: #{tpu_custom_call.1} parent=1 // pred_check_branch
      %23 = sbr.rel (0) target = $region21
    $region20: #{tpu_custom_call.1} parent=1 // pred_region
      _
    $region21: #{tpu_custom_call.1} parent=1 // pred_fallthru
      _
    // Predicated region
    $region22: #{tpu_custom_call.1} parent=1 // pred_check
      _
    $region23: #{tpu_custom_call.1} parent=1 // pred_check_branch
      %25 = sbr.rel (0) target = $region25
    $region24: #{tpu_custom_call.1} parent=1 // pred_region
      _
    $region25: #{tpu_custom_call.1} parent=1 // pred_fallthru
      _
    %v27 = vld [vmem:[%s1] sm:$0xff]
    %v28 = vld [vmem:[%s2] sm:$0xff]
    %30 = vset.pattern.permute.xlu0 0
    %31 = vperm.xlu0 %30, %v28
    %v32 = vpop.permute.xlu0 %31
    %v34 = vmul.f32 %v27, %v32
    %v35 = vpack.c.bf16 %v34, %v34
    %v36 = vld [vmem:[%s3] sm:$0xf]
    %v37 = vld [vmem:[%s3 + $0x4] sm:$0xf]
    %v38 = vld [vmem:[%s3 + $0x8] sm:$0xf]
    %v39 = vld [vmem:[%s3 + $0xc] sm:$0xf]
    %v44 = vunpack.c.l.b16 %v36
    %v45 = vunpack.c.l.b16 %v37
    %v46 = vunpack.c.l.b16 %v38
    %v47 = vunpack.c.l.b16 %v39
    %v48 = vpack.c.b16 %v45, %v44
    %v49 = vpack.c.b16 %v47, %v46
    %vm52 = vcmask 261120
    %v54 = vsel %vm52, %v35, 0
    %56 = vmatpush.bf16.msra.mxu0 0
    %57 = vmatpush.bf16.msra.mxu0 0
    %58 = vmatpush.bf16.msra.mxu0 0
    %59 = vmatpush.bf16.msra.mxu0 0
    %60 = vmatpush.bf16.msra.mxu0 0
    %61 = vmatpush.bf16.msra.mxu0 0
    %62 = vmatpush.bf16.msra.mxu0 %v49
    %63 = vmatpush.bf16.msra.mxu0 %v48
    %64 = vmatmul.bf16.gmra.mxu0 %v54
    %v65 = vpop.f32.mrf.mxu0
    %v66 = vadd.f32 0.0, %v65
    %v67 = vpop.f32.mrf.mxu0
    %68 = vdwg.mxu0
    %v69 = vld [vmem:[%s4] sm:$0x1]
    %v71 = vperm.slane %v69, 0
    %v73 = vmul.f32 %v66, %v71
    %s74 = sadd.s32 0, 0
    %s75 = smul.u32 %s74, 128
    %s76 = sadd.s32 %s75, 0
    %s77 = sld [smem:[#allocation3 + %s76]]
    %p78 = scmp.gt.s32.totalorder %s77, 0
    // Predicated region
    $region26: #{tpu_custom_call.1} parent=1 // pred_check
      %p79 = pneg %p78
    $region27: #{tpu_custom_call.1} parent=1 // pred_check_branch
      %81 = sbr.rel (%p79) target = $region29
    $region28: #{tpu_custom_call.1} parent=1 // pred_region
      %v82 = vlaneseq
      %v83 = vand.u32 %v82, 127
      %s84 = smul.u32 0, 128
      %v85 = vstv %s84
      %v86 = vadd.s32 %v83, %v85
      %v87 = vld [vmem:[%s5] sm:$0xff]
      %88 = vset.pattern.permute.xlu0 0
      %89 = vperm.xlu0 %88, %v87
      %v90 = vpop.permute.xlu0 %89
      %vm91 = vcmp.eq.s32.totalorder %v86, %v90
      %v92 = vld [vmem:[%s6] sm:$0xff]
      %94 = vset.pattern.permute.xlu0 0
      %95 = vperm.xlu0 %94, %v92
      %v96 = vpop.permute.xlu0 %95
      %v98 = vsel %vm91, %v96, %v73
      %99 = vst [vmem:[#allocation4] sm:$0xff] %v98
    $region29: #{tpu_custom_call.1} parent=1 // pred_fallthru
      _
    %p100 = scmp.le.s32.totalorder %s77, 0
    // Predicated region
    $region30: #{tpu_custom_call.1} parent=1 // pred_check
      %p101 = pneg %p100
    $region31: #{tpu_custom_call.1} parent=1 // pred_check_branch
      %103 = sbr.rel (%p101) target = $region33
    $region32: #{tpu_custom_call.1} parent=1 // pred_region
      %104 = vst [vmem:[#allocation4] sm:$0xff] %v73
    $region33: #{tpu_custom_call.1} parent=1 // pred_fallthru
      _
    // Predicated region
    $region34: #{tpu_custom_call.1} parent=1 // pred_check
      _
    $region35: #{tpu_custom_call.1} parent=1 // pred_check_branch
      %106 = sbr.rel (0) target = $region37
    $region36: #{tpu_custom_call.1} parent=1 // pred_region
      %108 = vsyncadd [#allocation5], 0
      %s110 = sshll.u32 [#allocation4], 4
      %s111 = int_to_ptr.vmem [resolvable:$true] %s110
      %s112 = sshll.u32 %s7, 4
      %s113 = int_to_ptr.hbm [resolvable:$true] %s112
      %115 = dma.vmem_to_hbm [thread:$0]  %s111, 128, %s113, [#allocation5]
    $region37: #{tpu_custom_call.1} parent=1 // pred_fallthru
      _
    // Predicated region
    $region38: #{tpu_custom_call.1} parent=1 // pred_check
      _
    $region39: #{tpu_custom_call.1} parent=1 // pred_check_branch
      %117 = sbr.rel (0) target = $region41
    $region40: #{tpu_custom_call.1} parent=1 // pred_region
      %119 = dma.done [#allocation5], 128
    $region41: #{tpu_custom_call.1} parent=1 // pred_fallthru
      _
    %120 = vsyncpa [#allocation5], 1

</llo_original>
